<compile_context>
chip_gen: v7x
topology: tpu7x:2x2x1
jax: 0.10.0
libtpu: 0.0.40
codegen_flags: <defaults>
</compile_context>

<pallas_src>
import functools

import jax
import jax.numpy as jnp
from jax import lax
from jax.experimental import pallas as pl
from jax.experimental.pallas import tpu as pltpu


def _round_up(x, m):
    return (x + m - 1) // m * m


def _vmem_budget_bytes():
    """85% of the chip's VMEM capacity (conservative fallback if the query fails)."""
    try:
        cap = int(pltpu.get_tpu_info().vmem_capacity_bytes)
    except Exception:
        cap = 56 * 1024 * 1024  # safe on v7x (64 MiB/TC) and below default-raise on v5e/v6e
    return int(cap * 0.85)


def _est_vmem_bytes(tq, tv, D, V):
    """Rough VMEM footprint of one grid step with double-buffered pipelining."""
    out_resident = 2 * tq * V * 4     # f32 output row, resident across vocab axis
    x_buf = 2 * tq * D * 2            # bf16 activations
    w_buf = 2 * tv * D * 2            # bf16 weight tile
    bias_buf = V * 4                  # f32 bias, resident
    scratch = 2 * (tq * 4)            # m / l running stats
    return out_resident + x_buf + w_buf + bias_buf + scratch


def proj_logsoftmax_kernel(x_ref, w_ref, b_ref, o_ref, m_ref, l_ref, *, tv):
    j = pl.program_id(1)

    @pl.when(j == 0)
    def _():
        m_ref[...] = jnp.full_like(m_ref, -jnp.inf)
        l_ref[...] = jnp.zeros_like(l_ref)

    # (tq, D) x (tv, D) contracted on D -> (tq, tv); bf16 operands, f32 MXU accumulation.
    logits = lax.dot_general(
        x_ref[...],
        w_ref[...],
        dimension_numbers=(((1,), (1,)), ((), ())),
        preferred_element_type=jnp.float32,
    )
    start = pl.multiple_of(j * tv, 128)
    logits = logits + b_ref[:, pl.ds(start, tv)]  # (1, tv) broadcast, f32

    # Online logsumexp over the vocab axis.
    m_prev = m_ref[...]
    m_new = jnp.maximum(m_prev, logits.max(axis=-1, keepdims=True))
    alpha = jnp.exp(m_prev - m_new)
    l_ref[...] = alpha * l_ref[...] + jnp.exp(logits - m_new).sum(axis=-1, keepdims=True)
    m_ref[...] = m_new

    # Stash raw logits into the VMEM-resident output row (lane-aligned slab).
    o_ref[:, pl.ds(start, tv)] = logits.astype(o_ref.dtype)

    # On the last vocab tile the full row is present: normalize in place.
    @pl.when(j == pl.num_programs(1) - 1)
    def _():
        lse = m_ref[...] + jnp.log(l_ref[...])  # (tq, 1)
        o_ref[...] = o_ref[...] - lse


def projection_log_softmax(x, weight, bias, *, tq=None, tv=None):
    """log_softmax(x @ weight.T + bias, axis=-1).

    x: (B, S, D); weight: (V, D) (PyTorch nn.Linear layout, NOT transposed); bias: (V,).
    Matmul runs with bf16 operands and f32 accumulation; output is f32.
    """
    B, S, D = x.shape
    V, D2 = weight.shape
    assert D == D2, (D, D2)
    assert V % 128 == 0, "vocab_size must be a multiple of 128"

    n_tok = B * S

    # Vocab tile: fill the MXU output dimension; small vocabs collapse to one step.
    if tv is None:
        tv = next(t for t in (512, 256, 128) if V % t == 0)

    vmem_budget = _vmem_budget_bytes()

    # Token tile: as big as VMEM allows (weight-stream reuse grows with tq), but keep
    # at least two tiles on the parallel axis when possible (v7x dual-TensorCore).
    if tq is None:
        if n_tok <= 8:
            cap = _round_up(max(n_tok, 1), 8)
        else:
            cap = max(8, _round_up(-(-n_tok // 2), 8))
        tq = 8
        for cand in (512, 384, 256, 128, 64, 32, 16, 8):
            if cand <= cap and _est_vmem_bytes(cand, tv, D, V) <= vmem_budget:
                tq = cand
                break

    # bf16 operands for the MXU (cast once per call; in production store weight in bf16
    # outside the hot path to avoid even this cast). No weight transpose anywhere.
    x2 = x.reshape(n_tok, D).astype(jnp.bfloat16)
    w_bf16 = weight.astype(jnp.bfloat16)          # (V, D), native layout
    b2 = bias.reshape(1, V).astype(jnp.float32)   # tiny; keep f32 for the add

    n_pad = _round_up(n_tok, tq)
    if n_pad != n_tok:
        x2 = jnp.pad(x2, ((0, n_pad - n_tok), (0, 0)))

    out = pl.pallas_call(
        functools.partial(proj_logsoftmax_kernel, tv=tv),
        out_shape=jax.ShapeDtypeStruct((n_pad, V), jnp.float32),
        grid_spec=pltpu.PrefetchScalarGridSpec(
            num_scalar_prefetch=0,
            grid=(n_pad // tq, V // tv),
            in_specs=[
                pl.BlockSpec((tq, D), lambda i, j: (i, 0)),   # x tile, resident over j
                pl.BlockSpec((tv, D), lambda i, j: (j, 0)),   # weight tile, (V, D) layout
                pl.BlockSpec((1, V), lambda i, j: (0, 0)),    # bias, resident whole grid
            ],
            out_specs=pl.BlockSpec((tq, V), lambda i, j: (i, 0)),  # full row resident
            scratch_shapes=[
                pltpu.VMEM((tq, 1), jnp.float32),  # running max
                pltpu.VMEM((tq, 1), jnp.float32),  # running sum-of-exp
            ],
        ),
        compiler_params=pltpu.CompilerParams(
            dimension_semantics=("parallel", "arbitrary"),
            vmem_limit_bytes=vmem_budget,
        ),
    )(x2, w_bf16, b2)

    return out[:n_tok].reshape(B, S, V)


if __name__ == "__main__":
    # Small shapes consistent with the module: batch=2, seq=8, d_model=64, vocab=512.
    B, S, D, V = 2, 8, 64, 512

    key = jax.random.PRNGKey(0)
    k_x, k_w, k_b = jax.random.split(key, 3)

    x = jax.random.normal(k_x, (B, S, D), dtype=jnp.float32)
    # nn.Linear-like init scale so logits stay O(1).
    weight = jax.random.normal(k_w, (V, D), dtype=jnp.float32) * (1.0 / jnp.sqrt(D))
    bias = jax.random.normal(k_b, (V,), dtype=jnp.float32) * 0.01

    out = projection_log_softmax(x, weight, bias)
    out = jax.block_until_ready(out)
    assert out.shape == (B, S, V), out.shape

    # Reference 1: same bf16 operand precision, f32 accumulation (tight tolerance).
    logits_bf16 = jnp.einsum(
        "bsd,vd->bsv",
        x.astype(jnp.bfloat16),
        weight.astype(jnp.bfloat16),
        preferred_element_type=jnp.float32,
    ) + bias
    ref_bf16 = jax.nn.log_softmax(logits_bf16, axis=-1)
    assert jnp.allclose(out, ref_bf16, atol=2e-3, rtol=2e-3), "mismatch vs bf16 reference"

    # Reference 2: full f32 math (loose tolerance, semantics sanity check).
    logits_f32 = jnp.einsum("bsd,vd->bsv", x, weight) + bias
    ref_f32 = jax.nn.log_softmax(logits_f32, axis=-1)
    assert jnp.allclose(out, ref_f32, atol=5e-2, rtol=5e-2), "mismatch vs f32 reference"

    print("KERNEL_OK")
</pallas_src>

<mosaic_0001>
module attributes {stable_mosaic.version = 11 : i64} {
  func.func @proj_logsoftmax_kernel(%arg0: i32, %arg1: i32, %arg2: memref<8x64xbf16, #tpu.memory_space<vmem>>, %arg3: memref<512x64xbf16, #tpu.memory_space<vmem>>, %arg4: memref<1x512xf32, #tpu.memory_space<vmem>>, %arg5: memref<8x512xf32, #tpu.memory_space<vmem>>, %arg6: memref<8x1xf32, #tpu.memory_space<vmem>>, %arg7: memref<8x1xf32, #tpu.memory_space<vmem>>) attributes {dimension_semantics = [#tpu.dimension_semantics<parallel>, #tpu.dimension_semantics<arbitrary>], iteration_bounds = array<i64: 2, 1>, scalar_prefetch = 0 : i64, scratch_operands = 2 : i64, tpu.core_type = #tpu.core_type<tc>, window_params = [{transform_indices = @transform_0, window_bounds = array<i64: 8, 64>}, {transform_indices = @transform_1, window_bounds = array<i64: 512, 64>}, {pipeline_mode = #tpu.pipeline_mode<synchronous>, transform_indices = @transform_2, window_bounds = array<i64: 1, 512>}, {transform_indices = @transform_3, window_bounds = array<i64: 8, 512>}]} {
    %c0_i32 = arith.constant 0 : i32
    %0 = arith.cmpi eq, %arg1, %c0_i32 : i32
    %1 = arith.extui %0 : i1 to i32
    %c0_i32_0 = arith.constant 0 : i32
    %2 = arith.cmpi ne, %1, %c0_i32_0 : i32
    scf.if %2 {
      %cst_18 = arith.constant 0xFF800000 : f32
      %33 = vector.broadcast %cst_18 : f32 to vector<8x1xf32>
      %c0_19 = arith.constant 0 : index
      %c0_20 = arith.constant 0 : index
      %34 = vector.load %arg6[%c0_19, %c0_20] : memref<8x1xf32, #tpu.memory_space<vmem>>, vector<8x1xf32>
      tpu.vector_store %arg6[%c0_19, %c0_20], %33 {strides = array<i32>} : memref<8x1xf32, #tpu.memory_space<vmem>>, vector<8x1xf32>,
      %cst_21 = arith.constant 0.000000e+00 : f32
      %35 = vector.broadcast %cst_21 : f32 to vector<8x1xf32>
      %c0_22 = arith.constant 0 : index
      %c0_23 = arith.constant 0 : index
      %36 = vector.load %arg7[%c0_22, %c0_23] : memref<8x1xf32, #tpu.memory_space<vmem>>, vector<8x1xf32>
      tpu.vector_store %arg7[%c0_22, %c0_23], %35 {strides = array<i32>} : memref<8x1xf32, #tpu.memory_space<vmem>>, vector<8x1xf32>,
    } else {
    }
    %c0 = arith.constant 0 : index
    %c0_1 = arith.constant 0 : index
    %3 = vector.load %arg2[%c0, %c0_1] : memref<8x64xbf16, #tpu.memory_space<vmem>>, vector<8x64xbf16>
    %c0_2 = arith.constant 0 : index
    %c0_3 = arith.constant 0 : index
    %4 = vector.load %arg3[%c0_2, %c0_3] : memref<512x64xbf16, #tpu.memory_space<vmem>>, vector<512x64xbf16>
    %cst = arith.constant dense<0.000000e+00> : vector<8x512xf32>
    %5 = tpu.matmul %3, %4, %cst {dimension_numbers = #tpu.dot_dimension_numbers<[1], [1], [0], [0], [0, 0, 1, 0], [], []>} : vector<8x64xbf16>, vector<512x64xbf16>, vector<8x512xf32> -> vector<8x512xf32>
    %c512_i32 = arith.constant 512 : i32
    %6 = arith.muli %arg1, %c512_i32 : i32
    %7 = tpu.assume_multiple %6, 128 : i32
    %c0_4 = arith.constant 0 : index
    %8 = arith.index_cast %7 : i32 to index
    %9 = vector.load %arg4[%c0_4, %8] : memref<1x512xf32, #tpu.memory_space<vmem>>, vector<1x512xf32>
    %10 = vector.broadcast %9 : vector<1x512xf32> to vector<8x512xf32>
    %11 = arith.addf %5, %10 : vector<8x512xf32>
    %c0_5 = arith.constant 0 : index
    %c0_6 = arith.constant 0 : index
    %12 = vector.load %arg6[%c0_5, %c0_6] : memref<8x1xf32, #tpu.memory_space<vmem>>, vector<8x1xf32>
    %cst_7 = arith.constant dense<0xFF800000> : vector<8xf32>
    %13 = vector.multi_reduction <maximumf>, %11, %cst_7 [1] : vector<8x512xf32> to vector<8xf32>
    %14 = vector.shape_cast %13 : vector<8xf32> to vector<8x1xf32>
    %15 = arith.maximumf %12, %14 : vector<8x1xf32>
    %16 = arith.subf %12, %15 : vector<8x1xf32>
    %17 = math.exp %16 : vector<8x1xf32>
    %c0_8 = arith.constant 0 : index
    %c0_9 = arith.constant 0 : index
    %18 = vector.load %arg7[%c0_8, %c0_9] : memref<8x1xf32, #tpu.memory_space<vmem>>, vector<8x1xf32>
    %19 = arith.mulf %17, %18 : vector<8x1xf32>
    %20 = vector.broadcast %15 : vector<8x1xf32> to vector<8x512xf32>
    %21 = arith.subf %11, %20 : vector<8x512xf32>
    %22 = math.exp %21 : vector<8x512xf32>
    %cst_10 = arith.constant dense<0.000000e+00> : vector<8xf32>
    %23 = vector.multi_reduction <add>, %22, %cst_10 [1] : vector<8x512xf32> to vector<8xf32>
    %24 = vector.shape_cast %23 : vector<8xf32> to vector<8x1xf32>
    %25 = arith.addf %19, %24 : vector<8x1xf32>
    %c0_11 = arith.constant 0 : index
    %c0_12 = arith.constant 0 : index
    %26 = vector.load %arg7[%c0_11, %c0_12] : memref<8x1xf32, #tpu.memory_space<vmem>>, vector<8x1xf32>
    tpu.vector_store %arg7[%c0_11, %c0_12], %25 {strides = array<i32>} : memref<8x1xf32, #tpu.memory_space<vmem>>, vector<8x1xf32>,
    %c0_13 = arith.constant 0 : index
    %c0_14 = arith.constant 0 : index
    %27 = vector.load %arg6[%c0_13, %c0_14] : memref<8x1xf32, #tpu.memory_space<vmem>>, vector<8x1xf32>
    tpu.vector_store %arg6[%c0_13, %c0_14], %15 {strides = array<i32>} : memref<8x1xf32, #tpu.memory_space<vmem>>, vector<8x1xf32>,
    %c0_15 = arith.constant 0 : index
    %28 = arith.index_cast %7 : i32 to index
    %29 = vector.load %arg5[%c0_15, %28] : memref<8x512xf32, #tpu.memory_space<vmem>>, vector<8x512xf32>
    tpu.vector_store %arg5[%c0_15, %28], %11 {strides = array<i32>} : memref<8x512xf32, #tpu.memory_space<vmem>>, vector<8x512xf32>,
    %c0_i32_16 = arith.constant 0 : i32
    %30 = arith.cmpi eq, %arg1, %c0_i32_16 : i32
    %31 = arith.extui %30 : i1 to i32
    %c0_i32_17 = arith.constant 0 : i32
    %32 = arith.cmpi ne, %31, %c0_i32_17 : i32
    scf.if %32 {
      %c0_18 = arith.constant 0 : index
      %c0_19 = arith.constant 0 : index
      %33 = vector.load %arg6[%c0_18, %c0_19] : memref<8x1xf32, #tpu.memory_space<vmem>>, vector<8x1xf32>
      %c0_20 = arith.constant 0 : index
      %c0_21 = arith.constant 0 : index
      %34 = vector.load %arg7[%c0_20, %c0_21] : memref<8x1xf32, #tpu.memory_space<vmem>>, vector<8x1xf32>
      %35 = math.log %34 : vector<8x1xf32>
      %36 = arith.addf %33, %35 : vector<8x1xf32>
      %c0_22 = arith.constant 0 : index
      %c0_23 = arith.constant 0 : index
      %37 = vector.load %arg5[%c0_22, %c0_23] : memref<8x512xf32, #tpu.memory_space<vmem>>, vector<8x512xf32>
      %38 = vector.broadcast %36 : vector<8x1xf32> to vector<8x512xf32>
      %39 = arith.subf %37, %38 : vector<8x512xf32>
      %c0_24 = arith.constant 0 : index
      %c0_25 = arith.constant 0 : index
      %40 = vector.load %arg5[%c0_24, %c0_25] : memref<8x512xf32, #tpu.memory_space<vmem>>, vector<8x512xf32>
      tpu.vector_store %arg5[%c0_24, %c0_25], %39 {strides = array<i32>} : memref<8x512xf32, #tpu.memory_space<vmem>>, vector<8x512xf32>,
    } else {
    }
    return
  }
  func.func @transform_0(%arg0: i32, %arg1: i32) -> (i32, i32) {
    %c0_i32 = arith.constant 0 : i32
    %c0_i32_0 = arith.constant 0 : i32
    return %arg0, %c0_i32 : i32, i32
  }
  func.func @transform_1(%arg0: i32, %arg1: i32) -> (i32, i32) {
    %c0_i32 = arith.constant 0 : i32
    %c0_i32_0 = arith.constant 0 : i32
    return %arg1, %c0_i32 : i32, i32
  }
  func.func @transform_2(%arg0: i32, %arg1: i32) -> (i32, i32) {
    %c0_i32 = arith.constant 0 : i32
    %c0_i32_0 = arith.constant 0 : i32
    %c0_i32_1 = arith.constant 0 : i32
    return %c0_i32, %c0_i32_0 : i32, i32
  }
  func.func @transform_3(%arg0: i32, %arg1: i32) -> (i32, i32) {
    %c0_i32 = arith.constant 0 : i32
    %c0_i32_0 = arith.constant 0 : i32
    return %arg0, %c0_i32 : i32, i32
  }
}

</mosaic_0001>

<llo_original>
// kernel: tpu_custom_call.1
$region0: #{tpu_custom_call.1}
  #allocation0 [shape = 'u32[]', space=smem, size = 0x4, offset = 0x4, fixed_abs, tag = 'smem constant byte address 0x4 - core index']
  #allocation1 [shape = 'u32[144,128]{1,0:T(1,128)}', space=vmem, size = 0x12000, scoped, tag = 'internal scratch']
  #allocation2 [shape = 'f32[8,1]{1,0:T(8,128)}', space=vmem, size = 0x1000, scoped, tag = 'scratch operand']
  #allocation3 [shape = 'f32[8,1]{1,0:T(8,128)}', space=vmem, size = 0x1000, scoped, tag = 'scratch operand']
  %s0 = inlined_call_operand.vmem [shape: bf16[16,64], index: 0, kind: input, shape index: {}]
  %s1 = inlined_call_operand.vmem [shape: bf16[512,64], index: 1, kind: input, shape index: {}]
  %s2 = inlined_call_operand.vmem [shape: f32[1,512], index: 2, kind: input, shape index: {}]
  %s3 = inlined_call_operand.hbm [shape: f32[16,512], index: 3, kind: output, shape index: {}]
  %s4 = sld [smem:[#allocation0]]
  $region53: #{tpu_custom_call.1} parent=0
    _
  %s6 = ssub.s32 1, %s4
  %s7 = scalar_select 0, %s6, %s4
  $region1: #{tpu_custom_call.1} parent=0
    #allocation4 [shape = 'u8[32768]{0}', space=vmem, size = 0x8000, scoped, tag = 'output window, operand 0']
    #allocation5 [shape = 's32[2]{0}', space=sflag, size = 0x8, scoped, tag = 'scoped memory for tpu_custom_call.1']
    %8 = vsyncpa [#allocation5], 0
    %s9 = scalar_lea.sflag [#allocation5], 1
    %10 = vsyncpa %s9, 0
    loop: start=0, step=1, limit=4
    $region2: #{tpu_custom_call.1} parent=1 // loop_pre_header
      _
    $region3: #{tpu_custom_call.1} parent=1 // loop_header
      %s12 = sphi 0, %s16
      %p13 = scmp.ge.s32.totalorder %s12, 4
      %s19 = sphi 0, %s31
      %s20 = sphi 0, %s27
      %s21 = sphi 0, %s19
      %s22 = sphi 0, %s20
      %s23 = sphi 0, %s21
      %s24 = sphi 0, %s22
      %s34 = sphi 0, %s36
      %s37 = sphi 0, %s34
      %s38 = sphi 0, %s37
      %s54 = sphi 0, %s38
      %s60 = sphi 0, %s62
      %s63 = sphi 0, %s60
      %s64 = sphi 0, %s63
      %s80 = sphi 0, %s64
      %s84 = sphi 0, %s84
      %s86 = sphi 0, %s84
      %s87 = sphi 0, %s86
      %s101 = sphi 0, %s87
      %s107 = sphi 0, %s109
      %s110 = sphi 0, %s107
      %s111 = sphi 0, %s110
      %s127 = sphi 0, %s111
    $region4: #{tpu_custom_call.1} parent=1 // loop_header_branch
      %15 = sbr.rel (%p13) target = $region8
    $region5: #{tpu_custom_call.1} parent=1 // loop_body
      %s17 = ssub.s32 %s12, 1
      %s18 = ssub.s32 %s12, 2
      %s25 = sadd.s32 1, %s20
      %p26 = scmp.ge.s32.totalorder %s25, 1
      %s27 = scalar_select %p26, 0, %s25
      %s28 = sadd.s32 1, %s19
      %s29 = scalar_select %p26, %s28, %s19
      %p30 = scmp.ge.s32.totalorder %s29, 2
      %s31 = scalar_select %p30, 0, %s29
      %s32 = ssub.s32 %s19, %s31
      %p33 = scmp.eq.s32.totalorder %s32, 0
      %s35 = sadd.s32 %s34, 1
      %s36 = scalar_select %p33, %s34, %s35
      %p39 = pneg %p33
      %p40 = scmp.eq.s32.totalorder %s12, 1
      %p41 = por %p39, %p40
      %p42 = scmp.ne.s32.totalorder %s34, %s37
      %p43 = scmp.eq.s32.totalorder %s12, 0
      %p44 = por %p42, %p43
      %p45 = scmp.ne.s32.totalorder %s34, %s37
      %p46 = scmp.eq.s32.totalorder %s17, 1
      %p47 = por %p45, %p46
      %p48 = scmp.ne.s32.totalorder %s37, %s38
      %p49 = scmp.eq.s32.totalorder %s17, 0
      %p50 = por %p48, %p49
      %p51 = scmp.ne.s32.totalorder %s37, %s38
      %p52 = scmp.eq.s32.totalorder %s18, 1
      %p53 = por %p51, %p52
      %p55 = scmp.ne.s32.totalorder %s38, %s54
      %p56 = scmp.eq.s32.totalorder %s18, 0
      %p57 = por %p55, %p56
      %s58 = ssub.s32 %s20, %s27
      %p59 = scmp.eq.s32.totalorder %s58, 0
      %s61 = sadd.s32 %s60, 1
      %s62 = scalar_select %p59, %s60, %s61
      %p65 = pneg %p59
      %p66 = scmp.eq.s32.totalorder %s12, 1
      %p67 = por %p65, %p66
      %p68 = scmp.ne.s32.totalorder %s60, %s63
      %p69 = scmp.eq.s32.totalorder %s12, 0
      %p70 = por %p68, %p69
      %p71 = scmp.ne.s32.totalorder %s60, %s63
      %p72 = scmp.eq.s32.totalorder %s17, 1
      %p73 = por %p71, %p72
      %p74 = scmp.ne.s32.totalorder %s63, %s64
      %p75 = scmp.eq.s32.totalorder %s17, 0
      %p76 = por %p74, %p75
      %p77 = scmp.ne.s32.totalorder %s63, %s64
      %p78 = scmp.eq.s32.totalorder %s18, 1
      %p79 = por %p77, %p78
      %p81 = scmp.ne.s32.totalorder %s64, %s80
      %p82 = scmp.eq.s32.totalorder %s18, 0
      %p83 = por %p81, %p82
      %s85 = sadd.s32 %s84, 1
      %p88 = scmp.eq.s32.totalorder %s12, 1
      %p89 = scmp.ne.s32.totalorder %s84, %s86
      %p90 = scmp.eq.s32.totalorder %s12, 0
      %p91 = por %p89, %p90
      %p92 = scmp.ne.s32.totalorder %s84, %s86
      %p93 = scmp.eq.s32.totalorder %s17, 1
      %p94 = por %p92, %p93
      %p95 = scmp.ne.s32.totalorder %s86, %s87
      %p96 = scmp.eq.s32.totalorder %s17, 0
      %p97 = por %p95, %p96
      %p98 = scmp.ne.s32.totalorder %s86, %s87
      %p99 = scmp.eq.s32.totalorder %s18, 1
      %p100 = por %p98, %p99
      %p102 = scmp.ne.s32.totalorder %s87, %s101
      %p103 = scmp.eq.s32.totalorder %s18, 0
      %p104 = por %p102, %p103
      %s105 = ssub.s32 %s19, %s31
      %p106 = scmp.eq.s32.totalorder %s105, 0
      %s108 = sadd.s32 %s107, 1
      %s109 = scalar_select %p106, %s107, %s108
      %p112 = pneg %p106
      %p113 = scmp.eq.s32.totalorder %s12, 1
      %p114 = por %p112, %p113
      %p115 = scmp.ne.s32.totalorder %s107, %s110
      %p116 = scmp.eq.s32.totalorder %s12, 0
      %p117 = por %p115, %p116
      %p118 = scmp.ne.s32.totalorder %s107, %s110
      %p119 = scmp.eq.s32.totalorder %s17, 1
      %p120 = por %p118, %p119
      %p121 = scmp.ne.s32.totalorder %s110, %s111
      %p122 = scmp.eq.s32.totalorder %s17, 0
      %p123 = por %p121, %p122
      %p124 = scmp.ne.s32.totalorder %s110, %s111
      %p125 = scmp.eq.s32.totalorder %s18, 1
      %p126 = por %p124, %p125
      %p128 = scmp.ne.s32.totalorder %s111, %s127
      %p129 = scmp.eq.s32.totalorder %s18, 0
      %p130 = por %p128, %p129
      %p131 = scmp.le.s32.totalorder 1, %s12
      %p132 = scmp.lt.s32.totalorder %s12, 3
      %p133 = pnand %p131, %p132
      %p134 = pneg %p133
      // Predicated region
      $region9: #{tpu_custom_call.1} parent=5 // pred_check
        _
      $region10: #{tpu_custom_call.1} parent=5 // pred_check_branch
        %136 = sbr.rel (%p133) target = $region12
      $region11: #{tpu_custom_call.1} parent=5 // pred_region
        %s137 = ssub.s32 %s12, 1
        // Predicated region
        $region13: #{tpu_custom_call.1} parent=11 // pred_check
          %p138 = pneg %p76
        $region14: #{tpu_custom_call.1} parent=11 // pred_check_branch
          %140 = sbr.rel (%p138) target = $region16
        $region15: #{tpu_custom_call.1} parent=11 // pred_region
          %s141 = smul.u32 64, %s22
          %p142 = scmp.lt.s32.totalorder %s141, 63
          %s143 = scalar_select %p142, %s141, 63
          %s144 = smul.addr %s143, 4
          %s145 = scalar_lea.vmem %s1, %s144
          %s146 = smul.u32 64, %s22
        $region16: #{tpu_custom_call.1} parent=11 // pred_fallthru
          _
        // Predicated region
        $region17: #{tpu_custom_call.1} parent=11 // pred_check
          %p147 = pneg %p97
        $region18: #{tpu_custom_call.1} parent=11 // pred_check_branch
          %149 = sbr.rel (%p147) target = $region20
        $region19: #{tpu_custom_call.1} parent=11 // pred_region
          _
        $region20: #{tpu_custom_call.1} parent=11 // pred_fallthru
          _
      $region12: #{tpu_custom_call.1} parent=5 // pred_fallthru
        _
      %p150 = scmp.lt.s32.totalorder %s12, 2
      // Predicated region
      $region21: #{tpu_custom_call.1} parent=5 // pred_check
        %p151 = pneg %p150
      $region22: #{tpu_custom_call.1} parent=5 // pred_check_branch
        %153 = sbr.rel (%p151) target = $region24
      $region23: #{tpu_custom_call.1} parent=5 // pred_region
        // Predicated region
        $region25: #{tpu_custom_call.1} parent=23 // pred_check
          %p154 = pneg %p44
        $region26: #{tpu_custom_call.1} parent=23 // pred_check_branch
          %156 = sbr.rel (%p154) target = $region28
        $region27: #{tpu_custom_call.1} parent=23 // pred_region
          %p157 = scmp.lt.s32.totalorder %s19, 1
          %s158 = scalar_select %p157, %s19, 1
          %s159 = smul.addr %s158, 4
          %s160 = scalar_lea.vmem %s0, %s159
        $region28: #{tpu_custom_call.1} parent=23 // pred_fallthru
          _
      $region24: #{tpu_custom_call.1} parent=5 // pred_fallthru
        _
      %p161 = scmp.le.s32.totalorder 1, %s12
      %p162 = scmp.lt.s32.totalorder %s12, 3
      %p163 = pnand %p161, %p162
      %p164 = pneg %p163
      // Predicated region
      $region29: #{tpu_custom_call.1} parent=5 // pred_check
        _
      $region30: #{tpu_custom_call.1} parent=5 // pred_check_branch
        %166 = sbr.rel (%p163) target = $region32
      $region31: #{tpu_custom_call.1} parent=5 // pred_region
        %s167 = ssub.s32 %s12, 1
        %p168 = scmp.lt.s32.totalorder %s21, 1
        %s169 = scalar_select %p168, %s21, 1
        %s170 = smul.addr %s169, 4
        %s171 = scalar_lea.vmem %s0, %s170
        %p172 = pneg %p50
        %p173 = pneg %p47
        %s174 = smul.u32 64, %s22
        %p175 = scmp.lt.s32.totalorder %s174, 63
        %s176 = scalar_select %p175, %s174, 63
        %s177 = smul.addr %s176, 4
        %s178 = scalar_lea.vmem %s1, %s177
        %p179 = pneg %p76
        %p180 = pneg %p73
        %p181 = pneg %p97
        %p182 = pneg %p94
        %p183 = pneg %p123
        %p184 = pneg %p120
        %s185 = sand.u32 %s110, 1
        %s186 = scalar_lea.sflag [#allocation5], %s185
        %s187 = sand.u32 %s110, 1
        %s188 = smul.addr %s187, 32
        %s189 = scalar_lea.vmem [#allocation4], %s188
        %p190 = scmp.lt.s32.totalorder %s21, 1
        %s191 = scalar_select %p190, %s21, 1
        %s192 = smul.addr %s191, 4
        %s193 = scalar_lea.vmem %s0, %s192
        %s194 = smul.u32 64, %s22
        %p195 = scmp.lt.s32.totalorder %s194, 63
        %s196 = scalar_select %p195, %s194, 63
        %s197 = smul.addr %s196, 4
        %s198 = scalar_lea.vmem %s1, %s197
        %s199 = smul.u32 64, %s22
        %p201 = scmp.eq.s32.totalorder %s22, 0
        // Predicated region
        $region33: #{tpu_custom_call.1} parent=31 // pred_check
          %p202 = pneg %p201
        $region34: #{tpu_custom_call.1} parent=31 // pred_check_branch
          %204 = sbr.rel (%p202) target = $region36
        $region35: #{tpu_custom_call.1} parent=31 // pred_region
          %vm205 = vcmask 7168
          %206 = vst.msk [vmem:[#allocation2] sm:$0xff] %vm205, -inf
          %207 = vst.msk [vmem:[#allocation3] sm:$0xff] %vm205, 0.0
        $region36: #{tpu_custom_call.1} parent=31 // pred_fallthru
          _
        %v208 = vld [vmem:[%s193] sm:$0xf]
        %v209 = vld [vmem:[%s198] sm:$0xf]
        %v210 = vld [vmem:[%s198 + $0x4] sm:$0xf]
        %v211 = vld [vmem:[%s198 + $0x8] sm:$0xf]
        %v212 = vld [vmem:[%s198 + $0xc] sm:$0xf]
        %v213 = vld [vmem:[%s198 + $0x10] sm:$0xf]
        %v214 = vld [vmem:[%s198 + $0x14] sm:$0xf]
        %v215 = vld [vmem:[%s198 + $0x18] sm:$0xf]
        %v216 = vld [vmem:[%s198 + $0x1c] sm:$0xf]
        %v217 = vld [vmem:[%s198 + $0x20] sm:$0xf]
        %v218 = vld [vmem:[%s198 + $0x24] sm:$0xf]
        %v219 = vld [vmem:[%s198 + $0x28] sm:$0xf]
        %v220 = vld [vmem:[%s198 + $0x2c] sm:$0xf]
        %v221 = vld [vmem:[%s198 + $0x30] sm:$0xf]
        %v222 = vld [vmem:[%s198 + $0x34] sm:$0xf]
        %v223 = vld [vmem:[%s198 + $0x38] sm:$0xf]
        %v224 = vld [vmem:[%s198 + $0x3c] sm:$0xf]
        %v225 = vld [vmem:[%s198 + $0x40] sm:$0xf]
        %v226 = vld [vmem:[%s198 + $0x44] sm:$0xf]
        %v227 = vld [vmem:[%s198 + $0x48] sm:$0xf]
        %v228 = vld [vmem:[%s198 + $0x4c] sm:$0xf]
        %v229 = vld [vmem:[%s198 + $0x50] sm:$0xf]
        %v230 = vld [vmem:[%s198 + $0x54] sm:$0xf]
        %v231 = vld [vmem:[%s198 + $0x58] sm:$0xf]
        %v232 = vld [vmem:[%s198 + $0x5c] sm:$0xf]
        %v233 = vld [vmem:[%s198 + $0x60] sm:$0xf]
        %v234 = vld [vmem:[%s198 + $0x64] sm:$0xf]
        %v235 = vld [vmem:[%s198 + $0x68] sm:$0xf]
        %v236 = vld [vmem:[%s198 + $0x6c] sm:$0xf]
        %v237 = vld [vmem:[%s198 + $0x70] sm:$0xf]
        %v238 = vld [vmem:[%s198 + $0x74] sm:$0xf]
        %v239 = vld [vmem:[%s198 + $0x78] sm:$0xf]
        %v240 = vld [vmem:[%s198 + $0x7c] sm:$0xf]
        %v241 = vld [vmem:[%s198 + $0x80] sm:$0xf]
        %v242 = vld [vmem:[%s198 + $0x84] sm:$0xf]
        %v243 = vld [vmem:[%s198 + $0x88] sm:$0xf]
        %v244 = vld [vmem:[%s198 + $0x8c] sm:$0xf]
        %v245 = vld [vmem:[%s198 + $0x90] sm:$0xf]
        %v246 = vld [vmem:[%s198 + $0x94] sm:$0xf]
        %v247 = vld [vmem:[%s198 + $0x98] sm:$0xf]
        %v248 = vld [vmem:[%s198 + $0x9c] sm:$0xf]
        %v249 = vld [vmem:[%s198 + $0xa0] sm:$0xf]
        %v250 = vld [vmem:[%s198 + $0xa4] sm:$0xf]
        %v251 = vld [vmem:[%s198 + $0xa8] sm:$0xf]
        %v252 = vld [vmem:[%s198 + $0xac] sm:$0xf]
        %v253 = vld [vmem:[%s198 + $0xb0] sm:$0xf]
        %v254 = vld [vmem:[%s198 + $0xb4] sm:$0xf]
        %v255 = vld [vmem:[%s198 + $0xb8] sm:$0xf]
        %v256 = vld [vmem:[%s198 + $0xbc] sm:$0xf]
        %v257 = vld [vmem:[%s198 + $0xc0] sm:$0xf]
        %v258 = vld [vmem:[%s198 + $0xc4] sm:$0xf]
        %v259 = vld [vmem:[%s198 + $0xc8] sm:$0xf]
        %v260 = vld [vmem:[%s198 + $0xcc] sm:$0xf]
        %v261 = vld [vmem:[%s198 + $0xd0] sm:$0xf]
        %v262 = vld [vmem:[%s198 + $0xd4] sm:$0xf]
        %v263 = vld [vmem:[%s198 + $0xd8] sm:$0xf]
        %v264 = vld [vmem:[%s198 + $0xdc] sm:$0xf]
        %v265 = vld [vmem:[%s198 + $0xe0] sm:$0xf]
        %v266 = vld [vmem:[%s198 + $0xe4] sm:$0xf]
        %v267 = vld [vmem:[%s198 + $0xe8] sm:$0xf]
        %v268 = vld [vmem:[%s198 + $0xec] sm:$0xf]
        %v269 = vld [vmem:[%s198 + $0xf0] sm:$0xf]
        %v270 = vld [vmem:[%s198 + $0xf4] sm:$0xf]
        %v271 = vld [vmem:[%s198 + $0xf8] sm:$0xf]
        %v272 = vld [vmem:[%s198 + $0xfc] sm:$0xf]
        %s273 = smul.u32 %s22, 512
        %s274 = sshra.s32 %s273, 7
        %s275 = sand.u32 %s273, 127
        %s276 = scalar_lea.vmem %s2, %s274
        %v277 = vld [vmem:[%s276] sm:$0xf]
        %v279 = vlaneseq
        %v280 = vshrl.u32 %v279, 7
        %v281 = vsub.s32 0, %v280
        %v282 = vrot.slane %v277, %v281
        %v283 = vlaneseq
        %v284 = vshrl.u32 %v283, 7
        %v285 = vsub.s32 1, %v284
        %v286 = vrot.slane %v277, %v285
        %v287 = vlaneseq
        %v288 = vshrl.u32 %v287, 7
        %v289 = vsub.s32 2, %v288
        %v290 = vrot.slane %v277, %v289
        %v291 = vlaneseq
        %v292 = vshrl.u32 %v291, 7
        %v293 = vsub.s32 3, %v292
        %v294 = vrot.slane %v277, %v293
        %v363 = vunpack.c.l.b16 %v209
        %v364 = vunpack.c.l.b16 %v210
        %v365 = vunpack.c.l.b16 %v211
        %v366 = vunpack.c.l.b16 %v212
        %v367 = vunpack.c.l.b16 %v213
        %v368 = vunpack.c.l.b16 %v214
        %v369 = vunpack.c.l.b16 %v215
        %v370 = vunpack.c.l.b16 %v216
        %v371 = vunpack.c.l.b16 %v217
        %v372 = vunpack.c.l.b16 %v218
        %v373 = vunpack.c.l.b16 %v219
        %v374 = vunpack.c.l.b16 %v220
        %v375 = vunpack.c.l.b16 %v221
        %v376 = vunpack.c.l.b16 %v222
        %v377 = vunpack.c.l.b16 %v223
        %v378 = vunpack.c.l.b16 %v224
        %v379 = vunpack.c.l.b16 %v225
        %v380 = vunpack.c.l.b16 %v226
        %v381 = vunpack.c.l.b16 %v227
        %v382 = vunpack.c.l.b16 %v228
        %v383 = vunpack.c.l.b16 %v229
        %v384 = vunpack.c.l.b16 %v230
        %v385 = vunpack.c.l.b16 %v231
        %v386 = vunpack.c.l.b16 %v232
        %v387 = vunpack.c.l.b16 %v233
        %v388 = vunpack.c.l.b16 %v234
        %v389 = vunpack.c.l.b16 %v235
        %v390 = vunpack.c.l.b16 %v236
        %v391 = vunpack.c.l.b16 %v237
        %v392 = vunpack.c.l.b16 %v238
        %v393 = vunpack.c.l.b16 %v239
        %v394 = vunpack.c.l.b16 %v240
        %v395 = vunpack.c.l.b16 %v241
        %v396 = vunpack.c.l.b16 %v242
        %v397 = vunpack.c.l.b16 %v243
        %v398 = vunpack.c.l.b16 %v244
        %v399 = vunpack.c.l.b16 %v245
        %v400 = vunpack.c.l.b16 %v246
        %v401 = vunpack.c.l.b16 %v247
        %v402 = vunpack.c.l.b16 %v248
        %v403 = vunpack.c.l.b16 %v249
        %v404 = vunpack.c.l.b16 %v250
        %v405 = vunpack.c.l.b16 %v251
        %v406 = vunpack.c.l.b16 %v252
        %v407 = vunpack.c.l.b16 %v253
        %v408 = vunpack.c.l.b16 %v254
        %v409 = vunpack.c.l.b16 %v255
        %v410 = vunpack.c.l.b16 %v256
        %v411 = vunpack.c.l.b16 %v257
        %v412 = vunpack.c.l.b16 %v258
        %v413 = vunpack.c.l.b16 %v259
        %v414 = vunpack.c.l.b16 %v260
        %v415 = vunpack.c.l.b16 %v261
        %v416 = vunpack.c.l.b16 %v262
        %v417 = vunpack.c.l.b16 %v263
        %v418 = vunpack.c.l.b16 %v264
        %v419 = vunpack.c.l.b16 %v265
        %v420 = vunpack.c.l.b16 %v266
        %v421 = vunpack.c.l.b16 %v267
        %v422 = vunpack.c.l.b16 %v268
        %v423 = vunpack.c.l.b16 %v269
        %v424 = vunpack.c.l.b16 %v270
        %v425 = vunpack.c.l.b16 %v271
        %v426 = vunpack.c.l.b16 %v272
        %v427 = vpack.c.b16 %v364, %v363
        %v428 = vpack.c.b16 %v366, %v365
        %v429 = vpack.c.b16 %v368, %v367
        %v430 = vpack.c.b16 %v370, %v369
        %v431 = vpack.c.b16 %v372, %v371
        %v432 = vpack.c.b16 %v374, %v373
        %v433 = vpack.c.b16 %v376, %v375
        %v434 = vpack.c.b16 %v378, %v377
        %v435 = vpack.c.b16 %v380, %v379
        %v436 = vpack.c.b16 %v382, %v381
        %v437 = vpack.c.b16 %v384, %v383
        %v438 = vpack.c.b16 %v386, %v385
        %v439 = vpack.c.b16 %v388, %v387
        %v440 = vpack.c.b16 %v390, %v389
        %v441 = vpack.c.b16 %v392, %v391
        %v442 = vpack.c.b16 %v394, %v393
        %v443 = vpack.c.b16 %v396, %v395
        %v444 = vpack.c.b16 %v398, %v397
        %v445 = vpack.c.b16 %v400, %v399
        %v446 = vpack.c.b16 %v402, %v401
        %v447 = vpack.c.b16 %v404, %v403
        %v448 = vpack.c.b16 %v406, %v405
        %v449 = vpack.c.b16 %v408, %v407
        %v450 = vpack.c.b16 %v410, %v409
        %v451 = vpack.c.b16 %v412, %v411
        %v452 = vpack.c.b16 %v414, %v413
        %v453 = vpack.c.b16 %v416, %v415
        %v454 = vpack.c.b16 %v418, %v417
        %v455 = vpack.c.b16 %v420, %v419
        %v456 = vpack.c.b16 %v422, %v421
        %v457 = vpack.c.b16 %v424, %v423
        %v458 = vpack.c.b16 %v426, %v425
        %vm459 = vcmask 523264
        %v461 = vsel %vm459, %v208, 0
        %v464 = vsel %vm459, %v427, 0
        %v467 = vsel %vm459, %v428, 0
        %v470 = vsel %vm459, %v429, 0
        %v473 = vsel %vm459, %v430, 0
        %v476 = vsel %vm459, %v431, 0
        %v479 = vsel %vm459, %v432, 0
        %v482 = vsel %vm459, %v433, 0
        %v485 = vsel %vm459, %v434, 0
        %v488 = vsel %vm459, %v435, 0
        %v491 = vsel %vm459, %v436, 0
        %v494 = vsel %vm459, %v437, 0
        %v497 = vsel %vm459, %v438, 0
        %v500 = vsel %vm459, %v439, 0
        %v503 = vsel %vm459, %v440, 0
        %v506 = vsel %vm459, %v441, 0
        %v509 = vsel %vm459, %v442, 0
        %v512 = vsel %vm459, %v443, 0
        %v515 = vsel %vm459, %v444, 0
        %v518 = vsel %vm459, %v445, 0
        %v521 = vsel %vm459, %v446, 0
        %v524 = vsel %vm459, %v447, 0
        %v527 = vsel %vm459, %v448, 0
        %v530 = vsel %vm459, %v449, 0
        %v533 = vsel %vm459, %v450, 0
        %v536 = vsel %vm459, %v451, 0
        %v539 = vsel %vm459, %v452, 0
        %v542 = vsel %vm459, %v453, 0
        %v545 = vsel %vm459, %v454, 0
        %v548 = vsel %vm459, %v455, 0
        %v551 = vsel %vm459, %v456, 0
        %v554 = vsel %vm459, %v457, 0
        %v557 = vsel %vm459, %v458, 0
        %559 = vmatprep.subr.bf16.mxu0 0
        %560 = vmatpush1.bf16.xpose.msra.mxu0 %v464
        %561 = vmatprep.subr.bf16.mxu0 0
        %562 = vmatpush1.bf16.xpose.msra.mxu0 %v467
        %563 = vmatprep.subr.bf16.mxu0 0
        %564 = vmatpush1.bf16.xpose.msra.mxu0 %v470
        %565 = vmatprep.subr.bf16.mxu0 0
        %566 = vmatpush1.bf16.xpose.msra.mxu0 %v473
        %567 = vmatprep.subr.bf16.mxu0 0
        %568 = vmatpush1.bf16.xpose.msra.mxu0 %v476
        %569 = vmatprep.subr.bf16.mxu0 0
        %570 = vmatpush1.bf16.xpose.msra.mxu0 %v479
        %571 = vmatprep.subr.bf16.mxu0 0
        %572 = vmatpush1.bf16.xpose.msra.mxu0 %v482
        %573 = vmatprep.subr.bf16.mxu0 0
        %574 = vmatpush1.bf16.xpose.msra.mxu0 %v485
        %575 = vmatprep.subr.bf16.mxu0 0
        %576 = vmatpush1.bf16.xpose.msra.mxu0 %v488
        %577 = vmatprep.subr.bf16.mxu0 0
        %578 = vmatpush1.bf16.xpose.msra.mxu0 %v491
        %579 = vmatprep.subr.bf16.mxu0 0
        %580 = vmatpush1.bf16.xpose.msra.mxu0 %v494
        %581 = vmatprep.subr.bf16.mxu0 0
        %582 = vmatpush1.bf16.xpose.msra.mxu0 %v497
        %583 = vmatprep.subr.bf16.mxu0 0
        %584 = vmatpush1.bf16.xpose.msra.mxu0 %v500
        %585 = vmatprep.subr.bf16.mxu0 0
        %586 = vmatpush1.bf16.xpose.msra.mxu0 %v503
        %587 = vmatprep.subr.bf16.mxu0 0
        %588 = vmatpush1.bf16.xpose.msra.mxu0 %v506
        %589 = vmatprep.subr.bf16.mxu0 0
        %590 = vmatpush1.bf16.xpose.msra.mxu0 %v509
        %591 = vmatprep.mubr.bf16.mxu0 0
        %592 = vmatmul.mubr.bf16.gmra.mrb[0].mxu0 %v461
        %v593 = vpop.f32.mrb[0].mxu0
        %v594 = vadd.f32 %v282, %v593
        %v595 = vpop.f32.mrb[0].mxu0
        %v596 = vadd.f32 %v286, %v595
        %v597 = vpop.f32.mrb[0].mxu0
        %v598 = vpop.f32.mrb[0].mxu0
        %599 = vdwg.mxu0
        %600 = vmatprep.subr.bf16.mxu0 0
        %601 = vmatpush1.bf16.xpose.msra.mxu0 %v512
        %602 = vmatprep.subr.bf16.mxu0 0
        %603 = vmatpush1.bf16.xpose.msra.mxu0 %v515
        %604 = vmatprep.subr.bf16.mxu0 0
        %605 = vmatpush1.bf16.xpose.msra.mxu0 %v518
        %606 = vmatprep.subr.bf16.mxu0 0
        %607 = vmatpush1.bf16.xpose.msra.mxu0 %v521
        %608 = vmatprep.subr.bf16.mxu0 0
        %609 = vmatpush1.bf16.xpose.msra.mxu0 %v524
        %610 = vmatprep.subr.bf16.mxu0 0
        %611 = vmatpush1.bf16.xpose.msra.mxu0 %v527
        %612 = vmatprep.subr.bf16.mxu0 0
        %613 = vmatpush1.bf16.xpose.msra.mxu0 %v530
        %614 = vmatprep.subr.bf16.mxu0 0
        %615 = vmatpush1.bf16.xpose.msra.mxu0 %v533
        %616 = vmatprep.subr.bf16.mxu0 0
        %617 = vmatpush1.bf16.xpose.msra.mxu0 %v536
        %618 = vmatprep.subr.bf16.mxu0 0
        %619 = vmatpush1.bf16.xpose.msra.mxu0 %v539
        %620 = vmatprep.subr.bf16.mxu0 0
        %621 = vmatpush1.bf16.xpose.msra.mxu0 %v542
        %622 = vmatprep.subr.bf16.mxu0 0
        %623 = vmatpush1.bf16.xpose.msra.mxu0 %v545
        %624 = vmatprep.subr.bf16.mxu0 0
        %625 = vmatpush1.bf16.xpose.msra.mxu0 %v548
        %626 = vmatprep.subr.bf16.mxu0 0
        %627 = vmatpush1.bf16.xpose.msra.mxu0 %v551
        %628 = vmatprep.subr.bf16.mxu0 0
        %629 = vmatpush1.bf16.xpose.msra.mxu0 %v554
        %630 = vmatprep.subr.bf16.mxu0 0
        %631 = vmatpush1.bf16.xpose.msra.mxu0 %v557
        %632 = vmatprep.mubr.bf16.mxu0 0
        %633 = vmatmul.mubr.bf16.gmra.mrb[0].mxu0 %v461
        %v634 = vpop.f32.mrb[0].mxu0
        %v635 = vadd.f32 %v290, %v634
        %v636 = vpop.f32.mrb[0].mxu0
        %v637 = vadd.f32 %v294, %v636
        %v638 = vpop.f32.mrb[0].mxu0
        %v639 = vpop.f32.mrb[0].mxu0
        %640 = vdwg.mxu0
        %v641 = vld [vmem:[#allocation2] sm:$0xff]
        %v642 = vmax.f32 %v594, %v596
        %v643 = vmax.f32 %v635, %v637
        %v644 = vmax.f32 %v642, %v643
        %645 = vmax.xlane.f32.xlu0 %v644
        %v646 = vpop.xlane.xlu0 %645
        %v647 = vmax.f32 %v641, %v646
        %v648 = vsub.f32 %v641, %v647
        %v649 = vmul.f32 %v648, 1.442695
        %v650 = vpow.pop %v649
        %v651 = vld [vmem:[#allocation3] sm:$0xff]
        %v652 = vmul.f32 %v650, %v651
        %654 = vset.pattern.permute.xlu0 0
        %655 = vperm.xlu0 %654, %v647
        %v656 = vpop.permute.xlu0 %655
        %v658 = vsub.f32 %v594, %v656
        %v659 = vsub.f32 %v596, %v656
        %v660 = vsub.f32 %v635, %v656
        %v661 = vsub.f32 %v637, %v656
        %v662 = vmul.f32 %v658, 1.442695
        %v663 = vpow.pop %v662
        %v664 = vmul.f32 %v659, 1.442695
        %v665 = vpow.pop %v664
        %v666 = vmul.f32 %v660, 1.442695
        %v667 = vpow.pop %v666
        %v668 = vmul.f32 %v661, 1.442695
        %v669 = vpow.pop %v668
        %v670 = vadd.f32 %v663, %v665
        %v671 = vadd.f32 %v670, %v667
        %v672 = vadd.f32 %v671, %v669
        %673 = vadd.xlane.f32.xlu0 %v672
        %v674 = vpop.xlane.xlu0 %673
        %v675 = vadd.f32 %v652, %v674
        %vm676 = vcmask 7168
        %677 = vst.msk [vmem:[#allocation3] sm:$0xff] %vm676, %v675
        %678 = vst.msk [vmem:[#allocation2] sm:$0xff] %vm676, %v647
        %s679 = smul.addr %s274, 8
        %s680 = scalar_lea.vmem %s189, %s679 [#allocation4]
        %681 = vst [vmem:[%s680] sm:$0xff] %v594
        %682 = vst [vmem:[%s680 + $0x8] sm:$0xff] %v596
        %683 = vst [vmem:[%s680 + $0x10] sm:$0xff] %v635
        %684 = vst [vmem:[%s680 + $0x18] sm:$0xff] %v637
        // Predicated region
        $region37: #{tpu_custom_call.1} parent=31 // pred_check
          %p685 = pneg %p201
        $region38: #{tpu_custom_call.1} parent=31 // pred_check_branch
          %687 = sbr.rel (%p685) target = $region40
        $region39: #{tpu_custom_call.1} parent=31 // pred_region
          %v688 = vld [vmem:[#allocation2] sm:$0xff]
          %v689 = vld [vmem:[#allocation3] sm:$0xff]
          %v690 = vlog2.pop %v689
          %v691 = vmul.f32 %v690, 0.6931472
          %v692 = vadd.f32 %v688, %v691
          %v693 = vld [vmem:[%s189] sm:$0xff]
          %v694 = vld [vmem:[%s189 + $0x8] sm:$0xff]
          %v695 = vld [vmem:[%s189 + $0x10] sm:$0xff]
          %v696 = vld [vmem:[%s189 + $0x18] sm:$0xff]
          %698 = vset.pattern.permute.xlu0 0
          %699 = vperm.xlu0 %698, %v692
          %v700 = vpop.permute.xlu0 %699
          %v702 = vsub.f32 %v693, %v700
          %v703 = vsub.f32 %v694, %v700
          %v704 = vsub.f32 %v695, %v700
          %v705 = vsub.f32 %v696, %v700
          %706 = vst [vmem:[%s189] sm:$0xff] %v702
          %707 = vst [vmem:[%s189 + $0x8] sm:$0xff] %v703
          %708 = vst [vmem:[%s189 + $0x10] sm:$0xff] %v704
          %709 = vst [vmem:[%s189 + $0x18] sm:$0xff] %v705
        $region40: #{tpu_custom_call.1} parent=31 // pred_fallthru
          _
        %s710 = sand.u32 %s110, 1
        %s711 = scalar_lea.sflag [#allocation5], %s710
        %s712 = sand.u32 %s110, 1
        %s713 = smul.addr %s712, 32
        %s714 = scalar_lea.vmem [#allocation4], %s713
        // Predicated region
        $region41: #{tpu_custom_call.1} parent=31 // pred_check
          %p715 = pneg %p120
        $region42: #{tpu_custom_call.1} parent=31 // pred_check_branch
          %717 = sbr.rel (%p715) target = $region44
        $region43: #{tpu_custom_call.1} parent=31 // pred_region
          %s719 = ssub.s32 512, 512
          %720 = vsyncadd %s711, %s719
          %s721 = smul.addr %s21, 4
          %s722 = smul.addr %s721, 128
          %s723 = scalar_lea.hbm %s3, %s722
          %s725 = sshll.u32 %s714, 4
          %s726 = int_to_ptr.vmem [resolvable:$true] %s725
          %728 = dma.vmem_to_hbm [thread:$0]  %s726, 512, %s723, %s711
        $region44: #{tpu_custom_call.1} parent=31 // pred_fallthru
          _
      $region32: #{tpu_custom_call.1} parent=5 // pred_fallthru
        _
      %p729 = scmp.le.s32.totalorder 2, %s12
      // Predicated region
      $region45: #{tpu_custom_call.1} parent=5 // pred_check
        %p730 = pneg %p729
      $region46: #{tpu_custom_call.1} parent=5 // pred_check_branch
        %732 = sbr.rel (%p730) target = $region48
      $region47: #{tpu_custom_call.1} parent=5 // pred_region
        %s733 = ssub.s32 %s12, 2
        // Predicated region
        $region49: #{tpu_custom_call.1} parent=47 // pred_check
          %p734 = pneg %p126
        $region50: #{tpu_custom_call.1} parent=47 // pred_check_branch
          %736 = sbr.rel (%p734) target = $region52
        $region51: #{tpu_custom_call.1} parent=47 // pred_region
          %s737 = sand.u32 %s111, 1
          %s738 = scalar_lea.sflag [#allocation5], %s737
          %s739 = sand.u32 %s111, 1
          %s740 = smul.addr %s739, 32
          %s741 = scalar_lea.vmem [#allocation4], %s740
          %742 = dma.done %s738, 512
        $region52: #{tpu_custom_call.1} parent=47 // pred_fallthru
          _
      $region48: #{tpu_custom_call.1} parent=5 // pred_fallthru
        _
    $region6: #{tpu_custom_call.1} parent=1 // loop_footer
      %s16 = sadd.s32 1, %s12
    $region7: #{tpu_custom_call.1} parent=1 // loop_footer_branch
      %11 = sbr.rel target = $region3
    $region8: #{tpu_custom_call.1} parent=1 // loop_exit
      _
    %743 = vsyncpa [#allocation5], 1
    %s744 = scalar_lea.sflag [#allocation5], 1
    %745 = vsyncpa %s744, 1

</llo_original>
